<compile_context>
chip_gen: v7x
topology: tpu7x:2x2x1
jax: 0.10.0
libtpu: 0.0.40
codegen_flags: <defaults>
</compile_context>

<pallas_src>
import functools

import jax
import jax.numpy as jnp
from jax.experimental import pallas as pl
from jax.experimental.pallas import tpu as pltpu

ALPHA = 0.1          # LeakyReLU negative_slope (activation='leaky_relu', alpha=0.1)
BN_EPS = 1e-5
LANE = 128
SUBPACK = 16         # bf16 sublane pack
TM_MAX = 512
VMEM_LIMIT_BYTES = 64 * 1024 * 1024


def _round_up(x, m):
    return ((x + m - 1) // m) * m


# ---------------- Pallas kernels (hot path) ----------------

def matmul_shift_lrelu_kernel(p_ref, w_ref, shift_ref, o_ref, *, alpha):
    # (TM, K) @ (K, C) on the MXU (bf16 in, f32 accumulate), fused folded-(bias+BN) shift
    # and LeakyReLU epilogue.
    acc = jnp.dot(p_ref[...], w_ref[...], preferred_element_type=jnp.float32)
    acc = acc + shift_ref[...]
    o_ref[...] = jnp.where(acc > 0, acc, alpha * acc).astype(o_ref.dtype)


def matmul_shift_lrelu_skip_kernel(p_ref, w_ref, skip_ref, ws_ref, shift_ref, o_ref, *, alpha):
    # Same as above plus the fused 1x1-shortcut matmul (tiny contraction dim) into the same
    # f32 accumulator — rides the same MXU pipeline, no wrapper-side concat.
    acc = jnp.dot(p_ref[...], w_ref[...], preferred_element_type=jnp.float32)
    acc = acc + jnp.dot(skip_ref[...], ws_ref[...], preferred_element_type=jnp.float32)
    acc = acc + shift_ref[...]
    o_ref[...] = jnp.where(acc > 0, acc, alpha * acc).astype(o_ref.dtype)


def fused_matmul_shift_lrelu(patches, w, shift, *, skip=None, ws=None, alpha, out_dtype):
    """Returns leaky_relu(patches @ w [+ skip @ ws] + shift)[:M, :C]; padding handled here."""
    M, K = patches.shape
    C = w.shape[1]

    Kp = _round_up(K, SUBPACK)        # bf16 sublane pack; blocks span full K so no 128 pad needed
    Cp = _round_up(C, LANE)           # lane-dense output (no masked partial stores)

    # Tile choice: >= 2 grid steps come from shrinking the tile, never from padding M upward.
    tm = min(TM_MAX, _round_up(pl.cdiv(_round_up(M, SUBPACK), 2), SUBPACK))
    Mp = _round_up(M, tm)

    p = jnp.pad(patches.astype(jnp.bfloat16), ((0, Mp - M), (0, Kp - K)))
    wp = jnp.pad(w.astype(jnp.bfloat16), ((0, Kp - K), (0, Cp - C)))
    sp = jnp.pad(shift.astype(jnp.float32).reshape(1, C), ((0, 0), (0, Cp - C)))

    in_specs = [
        pl.BlockSpec((tm, Kp), lambda i: (i, 0)),
        pl.BlockSpec((Kp, Cp), lambda i: (0, 0)),
    ]
    args = [p, wp]

    if skip is not None:
        Ks = skip.shape[1]
        Ksp = _round_up(Ks, SUBPACK)
        skp = jnp.pad(skip.astype(jnp.bfloat16), ((0, Mp - M), (0, Ksp - Ks)))
        wsp = jnp.pad(ws.astype(jnp.bfloat16), ((0, Ksp - Ks), (0, Cp - C)))
        in_specs += [
            pl.BlockSpec((tm, Ksp), lambda i: (i, 0)),
            pl.BlockSpec((Ksp, Cp), lambda i: (0, 0)),
        ]
        args += [skp, wsp]
        kernel = functools.partial(matmul_shift_lrelu_skip_kernel, alpha=alpha)
    else:
        kernel = functools.partial(matmul_shift_lrelu_kernel, alpha=alpha)

    in_specs.append(pl.BlockSpec((1, Cp), lambda i: (0, 0)))
    args.append(sp)

    out = pl.pallas_call(
        kernel,
        out_shape=jax.ShapeDtypeStruct((Mp, Cp), out_dtype),
        grid=(Mp // tm,),
        in_specs=in_specs,
        out_specs=pl.BlockSpec((tm, Cp), lambda i: (i, 0)),
        compiler_params=pltpu.CompilerParams(
            dimension_semantics=("parallel",),
            vmem_limit_bytes=VMEM_LIMIT_BYTES,
        ),
    )(*args)
    return out[:M, :C]


# ---------------- glue: im2col, BN folding, forward ----------------

def _im2col(x_nhwc, k, stride, pad):
    N, H, W, C = x_nhwc.shape
    Ho = (H + 2 * pad - k) // stride + 1
    Wo = (W + 2 * pad - k) // stride + 1
    xp = jnp.pad(x_nhwc, ((0, 0), (pad, pad), (pad, pad), (0, 0)))
    cols = []
    for dh in range(k):
        for dw in range(k):
            cols.append(xp[:, dh:dh + stride * (Ho - 1) + 1:stride,
                           dw:dw + stride * (Wo - 1) + 1:stride, :])
    patches = jnp.concatenate(cols, axis=-1)          # (N, Ho, Wo, k*k*C), (dh, dw, c) order
    return patches.reshape(N * Ho * Wo, k * k * C), (N, Ho, Wo)


def _fold_conv_bn(w_oikk, b, gamma, beta, mean, var):
    # Fold conv bias + BN affine into the weight matrix and a single per-column shift:
    #   bn(conv(x) + b) = x @ (W * scale) + (b - mean) * scale + beta
    scale = gamma / jnp.sqrt(var + BN_EPS)
    wmat = jnp.transpose(w_oikk, (2, 3, 1, 0)).reshape(-1, w_oikk.shape[0])   # (kh*kw*Cin, Cout)
    return wmat * scale[None, :], (b - mean) * scale + beta


def init_params(key, in_channels, out_channels, skip_conv=True, stride=1):
    ks = jax.random.split(key, 16)

    def u(k, shape, lo=-0.5, hi=0.5):
        return jax.random.uniform(k, shape, jnp.float32, lo, hi)

    p = {
        "w1": u(ks[0], (out_channels, in_channels, 3, 3)),
        "b1": u(ks[1], (out_channels,)),
        "bn1_gamma": u(ks[2], (out_channels,), 0.5, 1.5),
        "bn1_beta": u(ks[3], (out_channels,)),
        "bn1_mean": u(ks[4], (out_channels,)),
        "bn1_var": u(ks[5], (out_channels,), 0.5, 1.5),
        "w2": u(ks[6], (out_channels, out_channels, 3, 3)),
        "b2": u(ks[7], (out_channels,)),
        "bn2_gamma": u(ks[8], (out_channels,), 0.5, 1.5),
        "bn2_beta": u(ks[9], (out_channels,)),
        "bn2_mean": u(ks[10], (out_channels,)),
        "bn2_var": u(ks[11], (out_channels,), 0.5, 1.5),
    }
    has_shortcut = bool(skip_conv and (stride != 1 or in_channels != out_channels))
    if has_shortcut:
        p["ws"] = u(ks[12], (out_channels, in_channels, 1, 1))
        p["bs"] = u(ks[13], (out_channels,))
    return p, has_shortcut


def residual_block_forward(x_nchw, params, stride, has_shortcut):
    x = jnp.transpose(x_nchw, (0, 2, 3, 1)).astype(jnp.bfloat16)   # NCHW -> NHWC, bf16 stream
    Cout = params["w1"].shape[0]

    # convb1 + bn1 + act1 : one fused matmul
    w1, shift1 = _fold_conv_bn(params["w1"], params["b1"],
                               params["bn1_gamma"], params["bn1_beta"],
                               params["bn1_mean"], params["bn1_var"])
    p1, (N, Ho, Wo) = _im2col(x, 3, stride, 1)
    h = fused_matmul_shift_lrelu(p1, w1, shift1, alpha=ALPHA, out_dtype=jnp.bfloat16)
    h = h.reshape(N, Ho, Wo, Cout)

    # convb2 + bn2 (+ fused 1x1 shortcut) + act2 : one fused matmul (shortcut as a 2nd in-kernel dot)
    w2, shift2 = _fold_conv_bn(params["w2"], params["b2"],
                               params["bn2_gamma"], params["bn2_beta"],
                               params["bn2_mean"], params["bn2_var"])
    p2, _ = _im2col(h, 3, 1, 1)
    skip = ws = None
    if has_shortcut:
        skip = x[:, ::stride, ::stride, :].reshape(N * Ho * Wo, -1)   # (M, Cin): 1x1-conv input
        ws = params["ws"].reshape(Cout, -1).T                          # (Cin, Cout)
        shift2 = shift2 + params["bs"]
    out = fused_matmul_shift_lrelu(p2, w2, shift2, skip=skip, ws=ws,
                                   alpha=ALPHA, out_dtype=jnp.bfloat16)

    # dropout: identity in inference mode
    out = out.reshape(N, Ho, Wo, Cout)
    return jnp.transpose(out, (0, 3, 1, 2)).astype(jnp.float32)       # back to NCHW, upcast last


# ---------------- pure-JAX reference (correctness check) ----------------

def _conv2d_ref(x_nchw, w, b, stride, pad):
    y = jax.lax.conv_general_dilated(
        x_nchw, w, window_strides=(stride, stride),
        padding=((pad, pad), (pad, pad)),
        dimension_numbers=("NCHW", "OIHW", "NCHW"))
    return y + b[None, :, None, None]


def residual_block_ref(x, params, stride, has_shortcut):
    def bn(y, g, be, m, v):
        return (y - m[None, :, None, None]) / jnp.sqrt(v[None, :, None, None] + BN_EPS) \
            * g[None, :, None, None] + be[None, :, None, None]
    out = _conv2d_ref(x, params["w1"], params["b1"], stride, 1)
    out = bn(out, params["bn1_gamma"], params["bn1_beta"], params["bn1_mean"], params["bn1_var"])
    out = jnp.where(out > 0, out, ALPHA * out)
    out = _conv2d_ref(out, params["w2"], params["b2"], 1, 1)
    out = bn(out, params["bn2_gamma"], params["bn2_beta"], params["bn2_mean"], params["bn2_var"])
    if has_shortcut:
        out = out + _conv2d_ref(x, params["ws"], params["bs"], stride, 0)
    out = jnp.where(out > 0, out, ALPHA * out)
    return out


def _check(x, params, stride, has_shortcut):
    fwd = jax.jit(residual_block_forward, static_argnums=(2, 3))
    out = jax.block_until_ready(fwd(x, params, stride, has_shortcut))
    ref = jax.block_until_ready(residual_block_ref(x, params, stride, has_shortcut))
    assert out.shape == ref.shape, (out.shape, ref.shape)
    # bf16 matmul inputs + bf16 intermediate/output -> relaxed tolerance vs. the f32 reference.
    max_err = float(jnp.max(jnp.abs(out - ref)))
    ref_scale = float(jnp.max(jnp.abs(ref)))
    assert max_err <= 3e-2 * ref_scale + 1e-3, (max_err, ref_scale)


if __name__ == "__main__":
    key = jax.random.PRNGKey(0)
    k_x, k_p1, k_p2 = jax.random.split(key, 3)

    # Case 1: downsampling block with 1x1-conv shortcut (stride=2, Cin != Cout).
    N, Cin, H, W = 2, 4, 16, 16
    Cout, stride = 8, 2
    x = jax.random.normal(k_x, (N, Cin, H, W), jnp.float32)
    params, has_shortcut = init_params(k_p1, Cin, Cout, skip_conv=True, stride=stride)
    _check(x, params, stride, has_shortcut)

    # Case 2: same-shape block (stride=1, Cin == Cout) -> shortcut is None, no residual add
    # (matches the PyTorch module exactly).
    x2 = jax.random.normal(k_x, (N, Cout, H, W), jnp.float32)
    params2, has_shortcut2 = init_params(k_p2, Cout, Cout, skip_conv=True, stride=1)
    _check(x2, params2, 1, has_shortcut2)

    print("KERNEL_OK")
</pallas_src>

<mosaic_0001>
module attributes {stable_mosaic.version = 11 : i64} {
  func.func @matmul_shift_lrelu_kernel(%arg0: i32, %arg1: memref<64x48xbf16, #tpu.memory_space<vmem>>, %arg2: memref<48x128xbf16, #tpu.memory_space<vmem>>, %arg3: memref<1x128xf32, #tpu.memory_space<vmem>>, %arg4: memref<64x128xbf16, #tpu.memory_space<vmem>>) attributes {dimension_semantics = [#tpu.dimension_semantics<parallel>], iteration_bounds = array<i64: 2>, scalar_prefetch = 0 : i64, scratch_operands = 0 : i64, tpu.core_type = #tpu.core_type<tc>, window_params = [{transform_indices = @transform_0, window_bounds = array<i64: 64, 48>}, {pipeline_mode = #tpu.pipeline_mode<synchronous>, transform_indices = @transform_1, window_bounds = array<i64: 48, 128>}, {pipeline_mode = #tpu.pipeline_mode<synchronous>, transform_indices = @transform_2, window_bounds = array<i64: 1, 128>}, {transform_indices = @transform_3, window_bounds = array<i64: 64, 128>}]} {
    %c0 = arith.constant 0 : index
    %c0_0 = arith.constant 0 : index
    %0 = vector.load %arg1[%c0, %c0_0] : memref<64x48xbf16, #tpu.memory_space<vmem>>, vector<64x48xbf16>
    %c0_1 = arith.constant 0 : index
    %c0_2 = arith.constant 0 : index
    %1 = vector.load %arg2[%c0_1, %c0_2] : memref<48x128xbf16, #tpu.memory_space<vmem>>, vector<48x128xbf16>
    %cst = arith.constant dense<0.000000e+00> : vector<64x128xf32>
    %2 = tpu.matmul %0, %1, %cst {dimension_numbers = #tpu.dot_dimension_numbers<[1], [0], [0], [1], [0, 0, 1, 1], [], []>} : vector<64x48xbf16>, vector<48x128xbf16>, vector<64x128xf32> -> vector<64x128xf32>
    %c0_3 = arith.constant 0 : index
    %c0_4 = arith.constant 0 : index
    %3 = vector.load %arg3[%c0_3, %c0_4] : memref<1x128xf32, #tpu.memory_space<vmem>>, vector<1x128xf32>
    %4 = vector.broadcast %3 : vector<1x128xf32> to vector<64x128xf32>
    %5 = arith.addf %2, %4 : vector<64x128xf32>
    %cst_5 = arith.constant 0.000000e+00 : f32
    %6 = vector.broadcast %cst_5 : f32 to vector<64x128xf32>
    %7 = arith.cmpf ogt, %5, %6 : vector<64x128xf32>
    %cst_6 = arith.constant 1.000000e-01 : f32
    %8 = vector.broadcast %cst_6 : f32 to vector<64x128xf32>
    %9 = arith.mulf %8, %5 : vector<64x128xf32>
    %10 = arith.select %7, %5, %9 : vector<64x128xi1>, vector<64x128xf32>
    %11 = arith.truncf %10 : vector<64x128xf32> to vector<64x128xbf16>
    %c0_7 = arith.constant 0 : index
    %c0_8 = arith.constant 0 : index
    %12 = vector.load %arg4[%c0_7, %c0_8] : memref<64x128xbf16, #tpu.memory_space<vmem>>, vector<64x128xbf16>
    tpu.vector_store %arg4[%c0_7, %c0_8], %11 {strides = array<i32>} : memref<64x128xbf16, #tpu.memory_space<vmem>>, vector<64x128xbf16>,
    return
  }
  func.func @transform_0(%arg0: i32) -> (i32, i32) {
    %c0_i32 = arith.constant 0 : i32
    %c0_i32_0 = arith.constant 0 : i32
    return %arg0, %c0_i32 : i32, i32
  }
  func.func @transform_1(%arg0: i32) -> (i32, i32) {
    %c0_i32 = arith.constant 0 : i32
    %c0_i32_0 = arith.constant 0 : i32
    %c0_i32_1 = arith.constant 0 : i32
    return %c0_i32, %c0_i32_0 : i32, i32
  }
  func.func @transform_2(%arg0: i32) -> (i32, i32) {
    %c0_i32 = arith.constant 0 : i32
    %c0_i32_0 = arith.constant 0 : i32
    %c0_i32_1 = arith.constant 0 : i32
    return %c0_i32, %c0_i32_0 : i32, i32
  }
  func.func @transform_3(%arg0: i32) -> (i32, i32) {
    %c0_i32 = arith.constant 0 : i32
    %c0_i32_0 = arith.constant 0 : i32
    return %arg0, %c0_i32 : i32, i32
  }
}

module attributes {stable_mosaic.version = 11 : i64} {
  func.func @matmul_shift_lrelu_skip_kernel(%arg0: i32, %arg1: memref<64x80xbf16, #tpu.memory_space<vmem>>, %arg2: memref<80x128xbf16, #tpu.memory_space<vmem>>, %arg3: memref<64x16xbf16, #tpu.memory_space<vmem>>, %arg4: memref<16x128xbf16, #tpu.memory_space<vmem>>, %arg5: memref<1x128xf32, #tpu.memory_space<vmem>>, %arg6: memref<64x128xbf16, #tpu.memory_space<vmem>>) attributes {dimension_semantics = [#tpu.dimension_semantics<parallel>], iteration_bounds = array<i64: 2>, scalar_prefetch = 0 : i64, scratch_operands = 0 : i64, tpu.core_type = #tpu.core_type<tc>, window_params = [{transform_indices = @transform_0, window_bounds = array<i64: 64, 80>}, {pipeline_mode = #tpu.pipeline_mode<synchronous>, transform_indices = @transform_1, window_bounds = array<i64: 80, 128>}, {transform_indices = @transform_2, window_bounds = array<i64: 64, 16>}, {pipeline_mode = #tpu.pipeline_mode<synchronous>, transform_indices = @transform_3, window_bounds = array<i64: 16, 128>}, {pipeline_mode = #tpu.pipeline_mode<synchronous>, transform_indices = @transform_4, window_bounds = array<i64: 1, 128>}, {transform_indices = @transform_5, window_bounds = array<i64: 64, 128>}]} {
    %c0 = arith.constant 0 : index
    %c0_0 = arith.constant 0 : index
    %0 = vector.load %arg1[%c0, %c0_0] : memref<64x80xbf16, #tpu.memory_space<vmem>>, vector<64x80xbf16>
    %c0_1 = arith.constant 0 : index
    %c0_2 = arith.constant 0 : index
    %1 = vector.load %arg2[%c0_1, %c0_2] : memref<80x128xbf16, #tpu.memory_space<vmem>>, vector<80x128xbf16>
    %cst = arith.constant dense<0.000000e+00> : vector<64x128xf32>
    %2 = tpu.matmul %0, %1, %cst {dimension_numbers = #tpu.dot_dimension_numbers<[1], [0], [0], [1], [0, 0, 1, 1], [], []>} : vector<64x80xbf16>, vector<80x128xbf16>, vector<64x128xf32> -> vector<64x128xf32>
    %c0_3 = arith.constant 0 : index
    %c0_4 = arith.constant 0 : index
    %3 = vector.load %arg3[%c0_3, %c0_4] : memref<64x16xbf16, #tpu.memory_space<vmem>>, vector<64x16xbf16>
    %c0_5 = arith.constant 0 : index
    %c0_6 = arith.constant 0 : index
    %4 = vector.load %arg4[%c0_5, %c0_6] : memref<16x128xbf16, #tpu.memory_space<vmem>>, vector<16x128xbf16>
    %cst_7 = arith.constant dense<0.000000e+00> : vector<64x128xf32>
    %5 = tpu.matmul %3, %4, %cst_7 {dimension_numbers = #tpu.dot_dimension_numbers<[1], [0], [0], [1], [0, 0, 1, 1], [], []>} : vector<64x16xbf16>, vector<16x128xbf16>, vector<64x128xf32> -> vector<64x128xf32>
    %6 = arith.addf %2, %5 : vector<64x128xf32>
    %c0_8 = arith.constant 0 : index
    %c0_9 = arith.constant 0 : index
    %7 = vector.load %arg5[%c0_8, %c0_9] : memref<1x128xf32, #tpu.memory_space<vmem>>, vector<1x128xf32>
    %8 = vector.broadcast %7 : vector<1x128xf32> to vector<64x128xf32>
    %9 = arith.addf %6, %8 : vector<64x128xf32>
    %cst_10 = arith.constant 0.000000e+00 : f32
    %10 = vector.broadcast %cst_10 : f32 to vector<64x128xf32>
    %11 = arith.cmpf ogt, %9, %10 : vector<64x128xf32>
    %cst_11 = arith.constant 1.000000e-01 : f32
    %12 = vector.broadcast %cst_11 : f32 to vector<64x128xf32>
    %13 = arith.mulf %12, %9 : vector<64x128xf32>
    %14 = arith.select %11, %9, %13 : vector<64x128xi1>, vector<64x128xf32>
    %15 = arith.truncf %14 : vector<64x128xf32> to vector<64x128xbf16>
    %c0_12 = arith.constant 0 : index
    %c0_13 = arith.constant 0 : index
    %16 = vector.load %arg6[%c0_12, %c0_13] : memref<64x128xbf16, #tpu.memory_space<vmem>>, vector<64x128xbf16>
    tpu.vector_store %arg6[%c0_12, %c0_13], %15 {strides = array<i32>} : memref<64x128xbf16, #tpu.memory_space<vmem>>, vector<64x128xbf16>,
    return
  }
  func.func @transform_0(%arg0: i32) -> (i32, i32) {
    %c0_i32 = arith.constant 0 : i32
    %c0_i32_0 = arith.constant 0 : i32
    return %arg0, %c0_i32 : i32, i32
  }
  func.func @transform_1(%arg0: i32) -> (i32, i32) {
    %c0_i32 = arith.constant 0 : i32
    %c0_i32_0 = arith.constant 0 : i32
    %c0_i32_1 = arith.constant 0 : i32
    return %c0_i32, %c0_i32_0 : i32, i32
  }
  func.func @transform_2(%arg0: i32) -> (i32, i32) {
    %c0_i32 = arith.constant 0 : i32
    %c0_i32_0 = arith.constant 0 : i32
    return %arg0, %c0_i32 : i32, i32
  }
  func.func @transform_3(%arg0: i32) -> (i32, i32) {
    %c0_i32 = arith.constant 0 : i32
    %c0_i32_0 = arith.constant 0 : i32
    %c0_i32_1 = arith.constant 0 : i32
    return %c0_i32, %c0_i32_0 : i32, i32
  }
  func.func @transform_4(%arg0: i32) -> (i32, i32) {
    %c0_i32 = arith.constant 0 : i32
    %c0_i32_0 = arith.constant 0 : i32
    %c0_i32_1 = arith.constant 0 : i32
    return %c0_i32, %c0_i32_0 : i32, i32
  }
  func.func @transform_5(%arg0: i32) -> (i32, i32) {
    %c0_i32 = arith.constant 0 : i32
    %c0_i32_0 = arith.constant 0 : i32
    return %arg0, %c0_i32 : i32, i32
  }
}

</mosaic_0001>

<llo_original>
// kernel: residual_block_forward.2
$region0: #{residual_block_forward.2}
  #allocation0 [shape = 'u32[]', space=smem, size = 0x4, offset = 0x4, fixed_abs, tag = 'smem constant byte address 0x4 - core index']
  #allocation1 [shape = 'u32[144,128]{1,0:T(1,128)}', space=vmem, size = 0x12000, scoped, tag = 'internal scratch']
  %s0 = inlined_call_operand.hbm [shape: bf16[128,48], index: 0, kind: input, shape index: {}]
  %s1 = inlined_call_operand.hbm [shape: bf16[48,128], index: 1, kind: input, shape index: {}]
  %s2 = inlined_call_operand.hbm [shape: f32[1,128], index: 2, kind: input, shape index: {}]
  %s3 = inlined_call_operand.hbm [shape: bf16[128,128], index: 3, kind: output, shape index: {}]
  %s4 = sld [smem:[#allocation0]]
  $region57: #{residual_block_forward.2} parent=0
    _
  %s6 = ssub.s32 1, %s4
  %s7 = scalar_select 0, %s6, %s4
  $region1: #{residual_block_forward.2} parent=0
    #allocation2 [shape = 'u8[32768]{0}', space=vmem, size = 0x8000, scoped, tag = 'input window, operand 0']
    #allocation3 [shape = 's32[2]{0}', space=sflag, size = 0x8, scoped, tag = 'scoped memory for residual_block_forward.2']
    #allocation4 [shape = 's32[2]{0}', space=sflag, size = 0x8, scoped, tag = 'scoped memory for residual_block_forward.2']
    #allocation5 [shape = 'u8[12288]{0}', space=vmem, size = 0x3000, scoped, tag = 'input window, operand 1, single buffered']
    #allocation6 [shape = 's32[1]{0}', space=sflag, size = 0x4, scoped, tag = 'scoped memory for residual_block_forward.2']
    #allocation7 [shape = 'u8[512]{0}', space=vmem, size = 0x400, scoped, tag = 'input window, operand 2, single buffered']
    #allocation8 [shape = 'u8[32768]{0}', space=vmem, size = 0x8000, scoped, tag = 'output window, operand 0']
    %8 = vsyncpa [#allocation3], 0
    %s9 = scalar_lea.sflag [#allocation3], 1
    %10 = vsyncpa %s9, 0
    %11 = vsyncpa [#allocation6], 0
    %12 = vsyncpa [#allocation4], 0
    %s13 = scalar_lea.sflag [#allocation4], 1
    %14 = vsyncpa %s13, 0
    loop: start=0, step=1, limit=4
    $region2: #{residual_block_forward.2} parent=1 // loop_pre_header
      _
    $region3: #{residual_block_forward.2} parent=1 // loop_header
      %s16 = sphi 0, %s20
      %p17 = scmp.ge.s32.totalorder %s16, 4
      %s26 = sphi 0, %s28
      %s29 = sphi 0, %s26
      %s30 = sphi 0, %s29
      %s46 = sphi 0, %s30
      %s50 = sphi 0, %s50
      %s52 = sphi 0, %s50
      %s53 = sphi 0, %s52
      %s67 = sphi 0, %s53
      %s71 = sphi 0, %s71
      %s73 = sphi 0, %s71
      %s74 = sphi 0, %s73
      %s88 = sphi 0, %s74
      %s94 = sphi 0, %s96
      %s97 = sphi 0, %s94
      %s98 = sphi 0, %s97
      %s114 = sphi 0, %s98
    $region4: #{residual_block_forward.2} parent=1 // loop_header_branch
      %19 = sbr.rel (%p17) target = $region8
    $region5: #{residual_block_forward.2} parent=1 // loop_body
      %s21 = ssub.s32 %s16, 1
      %s22 = ssub.s32 %s16, 2
      %s23 = sadd.s32 %s16, 1
      %s24 = ssub.s32 %s16, %s23
      %p25 = scmp.eq.s32.totalorder %s24, 0
      %s27 = sadd.s32 %s26, 1
      %s28 = scalar_select %p25, %s26, %s27
      %p31 = pneg %p25
      %p32 = scmp.eq.s32.totalorder %s16, 1
      %p33 = por %p31, %p32
      %p34 = scmp.ne.s32.totalorder %s26, %s29
      %p35 = scmp.eq.s32.totalorder %s16, 0
      %p36 = por %p34, %p35
      %p37 = scmp.ne.s32.totalorder %s26, %s29
      %p38 = scmp.eq.s32.totalorder %s21, 1
      %p39 = por %p37, %p38
      %p40 = scmp.ne.s32.totalorder %s29, %s30
      %p41 = scmp.eq.s32.totalorder %s21, 0
      %p42 = por %p40, %p41
      %p43 = scmp.ne.s32.totalorder %s29, %s30
      %p44 = scmp.eq.s32.totalorder %s22, 1
      %p45 = por %p43, %p44
      %p47 = scmp.ne.s32.totalorder %s30, %s46
      %p48 = scmp.eq.s32.totalorder %s22, 0
      %p49 = por %p47, %p48
      %s51 = sadd.s32 %s50, 1
      %p54 = scmp.eq.s32.totalorder %s16, 1
      %p55 = scmp.ne.s32.totalorder %s50, %s52
      %p56 = scmp.eq.s32.totalorder %s16, 0
      %p57 = por %p55, %p56
      %p58 = scmp.ne.s32.totalorder %s50, %s52
      %p59 = scmp.eq.s32.totalorder %s21, 1
      %p60 = por %p58, %p59
      %p61 = scmp.ne.s32.totalorder %s52, %s53
      %p62 = scmp.eq.s32.totalorder %s21, 0
      %p63 = por %p61, %p62
      %p64 = scmp.ne.s32.totalorder %s52, %s53
      %p65 = scmp.eq.s32.totalorder %s22, 1
      %p66 = por %p64, %p65
      %p68 = scmp.ne.s32.totalorder %s53, %s67
      %p69 = scmp.eq.s32.totalorder %s22, 0
      %p70 = por %p68, %p69
      %s72 = sadd.s32 %s71, 1
      %p75 = scmp.eq.s32.totalorder %s16, 1
      %p76 = scmp.ne.s32.totalorder %s71, %s73
      %p77 = scmp.eq.s32.totalorder %s16, 0
      %p78 = por %p76, %p77
      %p79 = scmp.ne.s32.totalorder %s71, %s73
      %p80 = scmp.eq.s32.totalorder %s21, 1
      %p81 = por %p79, %p80
      %p82 = scmp.ne.s32.totalorder %s73, %s74
      %p83 = scmp.eq.s32.totalorder %s21, 0
      %p84 = por %p82, %p83
      %p85 = scmp.ne.s32.totalorder %s73, %s74
      %p86 = scmp.eq.s32.totalorder %s22, 1
      %p87 = por %p85, %p86
      %p89 = scmp.ne.s32.totalorder %s74, %s88
      %p90 = scmp.eq.s32.totalorder %s22, 0
      %p91 = por %p89, %p90
      %s92 = ssub.s32 %s16, %s23
      %p93 = scmp.eq.s32.totalorder %s92, 0
      %s95 = sadd.s32 %s94, 1
      %s96 = scalar_select %p93, %s94, %s95
      %p99 = pneg %p93
      %p100 = scmp.eq.s32.totalorder %s16, 1
      %p101 = por %p99, %p100
      %p102 = scmp.ne.s32.totalorder %s94, %s97
      %p103 = scmp.eq.s32.totalorder %s16, 0
      %p104 = por %p102, %p103
      %p105 = scmp.ne.s32.totalorder %s94, %s97
      %p106 = scmp.eq.s32.totalorder %s21, 1
      %p107 = por %p105, %p106
      %p108 = scmp.ne.s32.totalorder %s97, %s98
      %p109 = scmp.eq.s32.totalorder %s21, 0
      %p110 = por %p108, %p109
      %p111 = scmp.ne.s32.totalorder %s97, %s98
      %p112 = scmp.eq.s32.totalorder %s22, 1
      %p113 = por %p111, %p112
      %p115 = scmp.ne.s32.totalorder %s98, %s114
      %p116 = scmp.eq.s32.totalorder %s22, 0
      %p117 = por %p115, %p116
      %p118 = scmp.le.s32.totalorder 1, %s16
      %p119 = scmp.lt.s32.totalorder %s16, 3
      %p120 = pnand %p118, %p119
      %p121 = pneg %p120
      // Predicated region
      $region9: #{residual_block_forward.2} parent=5 // pred_check
        _
      $region10: #{residual_block_forward.2} parent=5 // pred_check_branch
        %123 = sbr.rel (%p120) target = $region12
      $region11: #{residual_block_forward.2} parent=5 // pred_region
        %s124 = ssub.s32 %s16, 1
        // Predicated region
        $region13: #{residual_block_forward.2} parent=11 // pred_check
          %p125 = pneg %p63
        $region14: #{residual_block_forward.2} parent=11 // pred_check_branch
          %127 = sbr.rel (%p125) target = $region16
        $region15: #{residual_block_forward.2} parent=11 // pred_region
          %s129 = ssub.s32 384, 384
          %130 = vsyncadd [#allocation6], %s129
          %s131 = sshll.u32 [#allocation5], 4
          %s132 = int_to_ptr.vmem [resolvable:$true] %s131
          %137 = dma.hbm_to_vmem [thread:$0]  %s1, 384, %s132, [#allocation6], 64, 64, 4
        $region16: #{residual_block_forward.2} parent=11 // pred_fallthru
          _
        // Predicated region
        $region17: #{residual_block_forward.2} parent=11 // pred_check
          %p138 = pneg %p84
        $region18: #{residual_block_forward.2} parent=11 // pred_check_branch
          %140 = sbr.rel (%p138) target = $region20
        $region19: #{residual_block_forward.2} parent=11 // pred_region
          %s142 = ssub.s32 16, 16
          %143 = vsyncadd [#allocation6], %s142
          %s145 = sshll.u32 [#allocation7], 4
          %s146 = int_to_ptr.vmem [resolvable:$true] %s145
          %148 = dma.hbm_to_vmem [thread:$0]  %s2, 16, %s146, [#allocation6]
        $region20: #{residual_block_forward.2} parent=11 // pred_fallthru
          _
      $region12: #{residual_block_forward.2} parent=5 // pred_fallthru
        _
      %p149 = scmp.lt.s32.totalorder %s16, 2
      // Predicated region
      $region21: #{residual_block_forward.2} parent=5 // pred_check
        %p150 = pneg %p149
      $region22: #{residual_block_forward.2} parent=5 // pred_check_branch
        %152 = sbr.rel (%p150) target = $region24
      $region23: #{residual_block_forward.2} parent=5 // pred_region
        // Predicated region
        $region25: #{residual_block_forward.2} parent=23 // pred_check
          %p153 = pneg %p36
        $region26: #{residual_block_forward.2} parent=23 // pred_check_branch
          %155 = sbr.rel (%p153) target = $region28
        $region27: #{residual_block_forward.2} parent=23 // pred_region
          %s156 = sand.u32 %s26, 1
          %s157 = scalar_lea.sflag [#allocation3], %s156
          %s158 = sand.u32 %s26, 1
          %s159 = smul.addr %s158, 32
          %s160 = scalar_lea.vmem [#allocation2], %s159
          %s161 = smul.u32 8, %s16
          %s163 = ssub.s32 512, 512
          %164 = vsyncadd %s157, %s163
          %s165 = smul.addr %s161, 64
          %s166 = scalar_lea.hbm %s0, %s165
          %s167 = sshll.u32 %s160, 4
          %s168 = int_to_ptr.vmem [resolvable:$true] %s167
          %173 = dma.hbm_to_vmem [thread:$0]  %s166, 512, %s168, %s157, 64, 64, 4
        $region28: #{residual_block_forward.2} parent=23 // pred_fallthru
          _
      $region24: #{residual_block_forward.2} parent=5 // pred_fallthru
        _
      %p174 = scmp.le.s32.totalorder 1, %s16
      %p175 = scmp.lt.s32.totalorder %s16, 3
      %p176 = pnand %p174, %p175
      %p177 = pneg %p176
      // Predicated region
      $region29: #{residual_block_forward.2} parent=5 // pred_check
        _
      $region30: #{residual_block_forward.2} parent=5 // pred_check_branch
        %179 = sbr.rel (%p176) target = $region32
      $region31: #{residual_block_forward.2} parent=5 // pred_region
        %s180 = ssub.s32 %s16, 1
        %s181 = sand.u32 %s29, 1
        %s182 = scalar_lea.sflag [#allocation3], %s181
        %s183 = sand.u32 %s29, 1
        %s184 = smul.addr %s183, 32
        %s185 = scalar_lea.vmem [#allocation2], %s184
        // Predicated region
        $region33: #{residual_block_forward.2} parent=31 // pred_check
          %p186 = pneg %p42
        $region34: #{residual_block_forward.2} parent=31 // pred_check_branch
          %188 = sbr.rel (%p186) target = $region36
        $region35: #{residual_block_forward.2} parent=31 // pred_region
          %189 = dma.done %s182, 512
        $region36: #{residual_block_forward.2} parent=31 // pred_fallthru
          _
        // Predicated region
        $region37: #{residual_block_forward.2} parent=31 // pred_check
          %p190 = pneg %p63
        $region38: #{residual_block_forward.2} parent=31 // pred_check_branch
          %192 = sbr.rel (%p190) target = $region40
        $region39: #{residual_block_forward.2} parent=31 // pred_region
          %193 = dma.done [#allocation6], 384
        $region40: #{residual_block_forward.2} parent=31 // pred_fallthru
          _
        // Predicated region
        $region41: #{residual_block_forward.2} parent=31 // pred_check
          %p194 = pneg %p84
        $region42: #{residual_block_forward.2} parent=31 // pred_check_branch
          %196 = sbr.rel (%p194) target = $region44
        $region43: #{residual_block_forward.2} parent=31 // pred_region
          %197 = dma.done [#allocation6], 16
        $region44: #{residual_block_forward.2} parent=31 // pred_fallthru
          _
        %s198 = sand.u32 %s29, 1
        %s199 = scalar_lea.sflag [#allocation3], %s198
        %s200 = sand.u32 %s29, 1
        %s201 = smul.addr %s200, 32
        %s202 = scalar_lea.vmem [#allocation2], %s201
        %p203 = pneg %p42
        %p204 = pneg %p39
        %p205 = pneg %p63
        %p206 = pneg %p60
        %p207 = pneg %p84
        %p208 = pneg %p81
        %p209 = pneg %p110
        %p210 = pneg %p107
        %s211 = sand.u32 %s97, 1
        %s212 = scalar_lea.sflag [#allocation4], %s211
        %s213 = sand.u32 %s97, 1
        %s214 = smul.addr %s213, 32
        %s215 = scalar_lea.vmem [#allocation8], %s214
        %s216 = smul.u32 8, %s21
        %s217 = smul.u32 8, %s21
        %v219 = vld [vmem:[%s185] sm:$0xf]
        %v220 = vld [vmem:[%s185 + $0x4] sm:$0xf]
        %v221 = vld [vmem:[%s185 + $0x8] sm:$0xf]
        %v222 = vld [vmem:[%s185 + $0xc] sm:$0xf]
        %v223 = vld [vmem:[%s185 + $0x10] sm:$0xf]
        %v224 = vld [vmem:[%s185 + $0x14] sm:$0xf]
        %v225 = vld [vmem:[%s185 + $0x18] sm:$0xf]
        %v226 = vld [vmem:[%s185 + $0x1c] sm:$0xf]
        %v227 = vld [vmem:[#allocation5] sm:$0xf]
        %v228 = vld [vmem:[#allocation5 + $0x4] sm:$0xf]
        %v229 = vld [vmem:[#allocation5 + $0x8] sm:$0xf]
        %v230 = vld [vmem:[#allocation5 + $0xc] sm:$0xf]
        %v231 = vld [vmem:[#allocation5 + $0x10] sm:$0xf]
        %v232 = vld [vmem:[#allocation5 + $0x14] sm:$0xf]
        %v233 = vld [vmem:[#allocation7] sm:$0x1]
        %v235 = vlaneseq
        %v236 = vshrl.u32 %v235, 7
        %v237 = vsub.s32 0, %v236
        %v238 = vrot.slane %v233, %v237
        %v248 = vunpack.c.l.b16 %v219
        %v249 = vunpack.c.l.b16 %v220
        %v250 = vunpack.c.l.b16 %v221
        %v251 = vunpack.c.l.b16 %v222
        %v252 = vunpack.c.l.b16 %v223
        %v253 = vunpack.c.l.b16 %v224
        %v254 = vunpack.c.l.b16 %v225
        %v255 = vunpack.c.l.b16 %v226
        %v256 = vpack.c.b16 %v249, %v248
        %v257 = vpack.c.b16 %v251, %v250
        %v258 = vpack.c.b16 %v253, %v252
        %v259 = vpack.c.b16 %v255, %v254
        %v266 = vunpack.c.l.b16 %v227
        %v267 = vunpack.c.l.b16 %v228
        %v268 = vunpack.c.l.b16 %v229
        %v269 = vunpack.c.l.b16 %v230
        %v270 = vunpack.c.l.b16 %v231
        %v271 = vunpack.c.l.b16 %v232
        %v272 = vpack.c.b16 %v267, %v266
        %v273 = vpack.c.b16 %v269, %v268
        %v274 = vpack.c.b16 %v271, %v270
        %vm278 = vcmask 392192
        %v280 = vsel %vm278, %v256, 0
        %v283 = vsel %vm278, %v257, 0
        %v286 = vsel %vm278, %v258, 0
        %v289 = vsel %vm278, %v259, 0
        %291 = vmatprep.subr.bf16.mxu0 0
        %292 = vmatpush1.bf16.msra.mxu0 %v272
        %293 = vmatprep.subr.bf16.mxu0 0
        %294 = vmatpush1.bf16.msra.mxu0 %v273
        %295 = vmatprep.subr.bf16.mxu0 0
        %296 = vmatpush1.bf16.msra.mxu0 %v274
        %297 = vmatprep.subr.bf16.mxu0 0
        %298 = vmatpush1.bf16.msra.mxu0 0
        %299 = vmatprep.subr.bf16.mxu0 0
        %300 = vmatpush1.bf16.msra.mxu0 0
        %301 = vmatprep.subr.bf16.mxu0 0
        %302 = vmatpush1.bf16.msra.mxu0 0
        %303 = vmatprep.subr.bf16.mxu0 0
        %304 = vmatpush1.bf16.msra.mxu0 0
        %305 = vmatprep.subr.bf16.mxu0 0
        %306 = vmatpush1.bf16.msra.mxu0 0
        %307 = vmatprep.subr.bf16.mxu0 0
        %308 = vmatpush1.bf16.msra.mxu0 0
        %309 = vmatprep.subr.bf16.mxu0 0
        %310 = vmatpush1.bf16.msra.mxu0 0
        %311 = vmatprep.subr.bf16.mxu0 0
        %312 = vmatpush1.bf16.msra.mxu0 0
        %313 = vmatprep.subr.bf16.mxu0 0
        %314 = vmatpush1.bf16.msra.mxu0 0
        %315 = vmatprep.subr.bf16.mxu0 0
        %316 = vmatpush1.bf16.msra.mxu0 0
        %317 = vmatprep.subr.bf16.mxu0 0
        %318 = vmatpush1.bf16.msra.mxu0 0
        %319 = vmatprep.subr.bf16.mxu0 0
        %320 = vmatpush1.bf16.msra.mxu0 0
        %321 = vmatprep.subr.bf16.mxu0 0
        %322 = vmatpush1.bf16.msra.mxu0 0
        %323 = vmatprep.mubr.bf16.mxu0 0
        %324 = vmatmul.mubr.bf16.gmra.mrb[0].mxu0 %v280
        %v325 = vpop.f32.mrb[0].mxu0
        %v326 = vadd.f32 %v238, %v325
        %v327 = vpop.f32.mrb[0].mxu0
        %v328 = vpop.f32.mrb[0].mxu0
        %v329 = vadd.f32 %v238, %v328
        %v330 = vpop.f32.mrb[0].mxu0
        %331 = vmatprep.mubr.bf16.mxu0 0
        %332 = vmatmul.mubr.bf16.gmra.mrb[0].mxu0 %v283
        %v333 = vpop.f32.mrb[0].mxu0
        %v334 = vadd.f32 %v238, %v333
        %v335 = vpop.f32.mrb[0].mxu0
        %v336 = vpop.f32.mrb[0].mxu0
        %v337 = vadd.f32 %v238, %v336
        %v338 = vpop.f32.mrb[0].mxu0
        %339 = vmatprep.mubr.bf16.mxu0 0
        %340 = vmatmul.mubr.bf16.gmra.mrb[0].mxu0 %v286
        %v341 = vpop.f32.mrb[0].mxu0
        %v342 = vadd.f32 %v238, %v341
        %v343 = vpop.f32.mrb[0].mxu0
        %v344 = vpop.f32.mrb[0].mxu0
        %v345 = vadd.f32 %v238, %v344
        %v346 = vpop.f32.mrb[0].mxu0
        %347 = vmatprep.mubr.bf16.mxu0 0
        %348 = vmatmul.mubr.bf16.gmra.mrb[0].mxu0 %v289
        %v349 = vpop.f32.mrb[0].mxu0
        %v350 = vadd.f32 %v238, %v349
        %v351 = vpop.f32.mrb[0].mxu0
        %v352 = vpop.f32.mrb[0].mxu0
        %v353 = vadd.f32 %v238, %v352
        %v354 = vpop.f32.mrb[0].mxu0
        %355 = vdwg.mxu0
        %vm356 = vcmp.gt.f32.partialorder %v326, 0.0
        %vm357 = vcmp.gt.f32.partialorder %v329, 0.0
        %vm358 = vcmp.gt.f32.partialorder %v334, 0.0
        %vm359 = vcmp.gt.f32.partialorder %v337, 0.0
        %vm360 = vcmp.gt.f32.partialorder %v342, 0.0
        %vm361 = vcmp.gt.f32.partialorder %v345, 0.0
        %vm362 = vcmp.gt.f32.partialorder %v350, 0.0
        %vm363 = vcmp.gt.f32.partialorder %v353, 0.0
        %v364 = vmul.f32 %v326, 0.1
        %v365 = vmul.f32 %v329, 0.1
        %v366 = vmul.f32 %v334, 0.1
        %v367 = vmul.f32 %v337, 0.1
        %v368 = vmul.f32 %v342, 0.1
        %v369 = vmul.f32 %v345, 0.1
        %v370 = vmul.f32 %v350, 0.1
        %v371 = vmul.f32 %v353, 0.1
        %v372 = vsel %vm356, %v326, %v364
        %v373 = vsel %vm357, %v329, %v365
        %v374 = vsel %vm358, %v334, %v366
        %v375 = vsel %vm359, %v337, %v367
        %v376 = vsel %vm360, %v342, %v368
        %v377 = vsel %vm361, %v345, %v369
        %v378 = vsel %vm362, %v350, %v370
        %v379 = vsel %vm363, %v353, %v371
        %v380 = vpack.c.bf16 %v373, %v372
        %v381 = vpack.c.bf16 %v375, %v374
        %v382 = vpack.c.bf16 %v377, %v376
        %v383 = vpack.c.bf16 %v379, %v378
        %v388 = vunpack.c.l.b16 %v380
        %v389 = vunpack.c.h.b16 %v380
        %v390 = vunpack.c.l.b16 %v381
        %v391 = vunpack.c.h.b16 %v381
        %v392 = vunpack.c.l.b16 %v382
        %v393 = vunpack.c.h.b16 %v382
        %v394 = vunpack.c.l.b16 %v383
        %v395 = vunpack.c.h.b16 %v383
        %v396 = vpack.c.b16 %v388, %v388
        %v397 = vpack.c.b16 %v389, %v389
        %v398 = vpack.c.b16 %v390, %v390
        %v399 = vpack.c.b16 %v391, %v391
        %v400 = vpack.c.b16 %v392, %v392
        %v401 = vpack.c.b16 %v393, %v393
        %v402 = vpack.c.b16 %v394, %v394
        %v403 = vpack.c.b16 %v395, %v395
        %412 = vst [vmem:[%s215] sm:$0xf] %v396
        %413 = vst [vmem:[%s215 + $0x4] sm:$0xf] %v397
        %414 = vst [vmem:[%s215 + $0x8] sm:$0xf] %v398
        %415 = vst [vmem:[%s215 + $0xc] sm:$0xf] %v399
        %416 = vst [vmem:[%s215 + $0x10] sm:$0xf] %v400
        %417 = vst [vmem:[%s215 + $0x14] sm:$0xf] %v401
        %418 = vst [vmem:[%s215 + $0x18] sm:$0xf] %v402
        %419 = vst [vmem:[%s215 + $0x1c] sm:$0xf] %v403
        %s420 = sand.u32 %s97, 1
        %s421 = scalar_lea.sflag [#allocation4], %s420
        %s422 = sand.u32 %s97, 1
        %s423 = smul.addr %s422, 32
        %s424 = scalar_lea.vmem [#allocation8], %s423
        // Predicated region
        $region45: #{residual_block_forward.2} parent=31 // pred_check
          %p425 = pneg %p107
        $region46: #{residual_block_forward.2} parent=31 // pred_check_branch
          %427 = sbr.rel (%p425) target = $region48
        $region47: #{residual_block_forward.2} parent=31 // pred_region
          %s428 = smul.u32 8, %s21
          %s430 = ssub.s32 512, 512
          %431 = vsyncadd %s421, %s430
          %s432 = smul.addr %s428, 64
          %s433 = scalar_lea.hbm %s3, %s432
          %s434 = sshll.u32 %s424, 4
          %s435 = int_to_ptr.vmem [resolvable:$true] %s434
          %440 = dma.vmem_to_hbm [thread:$0]  %s435, 512, %s433, %s421, 64, 64, 4
        $region48: #{residual_block_forward.2} parent=31 // pred_fallthru
          _
      $region32: #{residual_block_forward.2} parent=5 // pred_fallthru
        _
      %p441 = scmp.le.s32.totalorder 2, %s16
      // Predicated region
      $region49: #{residual_block_forward.2} parent=5 // pred_check
        %p442 = pneg %p441
      $region50: #{residual_block_forward.2} parent=5 // pred_check_branch
        %444 = sbr.rel (%p442) target = $region52
      $region51: #{residual_block_forward.2} parent=5 // pred_region
        %s445 = ssub.s32 %s16, 2
        // Predicated region
        $region53: #{residual_block_forward.2} parent=51 // pred_check
          %p446 = pneg %p113
        $region54: #{residual_block_forward.2} parent=51 // pred_check_branch
          %448 = sbr.rel (%p446) target = $region56
        $region55: #{residual_block_forward.2} parent=51 // pred_region
          %s449 = sand.u32 %s98, 1
          %s450 = scalar_lea.sflag [#allocation4], %s449
          %s451 = sand.u32 %s98, 1
          %s452 = smul.addr %s451, 32
          %s453 = scalar_lea.vmem [#allocation8], %s452
          %454 = dma.done %s450, 512
        $region56: #{residual_block_forward.2} parent=51 // pred_fallthru
          _
      $region52: #{residual_block_forward.2} parent=5 // pred_fallthru
        _
    $region6: #{residual_block_forward.2} parent=1 // loop_footer
      %s20 = sadd.s32 1, %s16
    $region7: #{residual_block_forward.2} parent=1 // loop_footer_branch
      %15 = sbr.rel target = $region3
    $region8: #{residual_block_forward.2} parent=1 // loop_exit
      _
    %455 = vsyncpa [#allocation3], 1
    %s456 = scalar_lea.sflag [#allocation3], 1
    %457 = vsyncpa %s456, 1
    %458 = vsyncpa [#allocation6], 1
    %459 = vsyncpa [#allocation4], 1
    %s460 = scalar_lea.sflag [#allocation4], 1
    %461 = vsyncpa %s460, 1

// kernel: residual_block_forward.3
$region0: #{residual_block_forward.3}
  #allocation0 [shape = 'u32[]', space=smem, size = 0x4, offset = 0x4, fixed_abs, tag = 'smem constant byte address 0x4 - core index']
  #allocation1 [shape = 'u32[144,128]{1,0:T(1,128)}', space=vmem, size = 0x12000, scoped, tag = 'internal scratch']
  %s0 = inlined_call_operand.hbm [shape: bf16[128,80], index: 0, kind: input, shape index: {}]
  %s1 = inlined_call_operand.hbm [shape: bf16[80,128], index: 1, kind: input, shape index: {}]
  %s2 = inlined_call_operand.hbm [shape: bf16[128,16], index: 2, kind: input, shape index: {}]
  %s3 = inlined_call_operand.hbm [shape: bf16[16,128], index: 3, kind: input, shape index: {}]
  %s4 = inlined_call_operand.hbm [shape: f32[1,128], index: 4, kind: input, shape index: {}]
  %s5 = inlined_call_operand.hbm [shape: bf16[128,128], index: 5, kind: output, shape index: {}]
  %s6 = sld [smem:[#allocation0]]
  $region73: #{residual_block_forward.3} parent=0
    _
  %s8 = ssub.s32 1, %s6
  %s9 = scalar_select 0, %s8, %s6
  $region1: #{residual_block_forward.3} parent=0
    #allocation2 [shape = 'u8[32768]{0}', space=vmem, size = 0x8000, scoped, tag = 'input window, operand 0']
    #allocation3 [shape = 's32[2]{0}', space=sflag, size = 0x8, scoped, tag = 'scoped memory for residual_block_forward.3']
    #allocation4 [shape = 's32[2]{0}', space=sflag, size = 0x8, scoped, tag = 'scoped memory for residual_block_forward.3']
    #allocation5 [shape = 'u8[20480]{0}', space=vmem, size = 0x5000, scoped, tag = 'input window, operand 1, single buffered']
    #allocation6 [shape = 's32[1]{0}', space=sflag, size = 0x4, scoped, tag = 'scoped memory for residual_block_forward.3']
    #allocation7 [shape = 'u8[32768]{0}', space=vmem, size = 0x8000, scoped, tag = 'input window, operand 2']
    #allocation8 [shape = 'u8[4096]{0}', space=vmem, size = 0x1000, scoped, tag = 'input window, operand 3, single buffered']
    #allocation9 [shape = 'u8[512]{0}', space=vmem, size = 0x400, scoped, tag = 'input window, operand 4, single buffered']
    #allocation10 [shape = 's32[1]{0}', space=sflag, size = 0x4, scoped, tag = 'scoped memory for residual_block_forward.3']
    #allocation11 [shape = 'u8[32768]{0}', space=vmem, size = 0x8000, scoped, tag = 'output window, operand 0']
    %10 = vsyncpa [#allocation3], 0
    %s11 = scalar_lea.sflag [#allocation3], 1
    %12 = vsyncpa %s11, 0
    %13 = vsyncpa [#allocation6], 0
    %14 = vsyncpa [#allocation10], 0
    %15 = vsyncpa [#allocation4], 0
    %s16 = scalar_lea.sflag [#allocation4], 1
    %17 = vsyncpa %s16, 0
    loop: start=0, step=1, limit=4
    $region2: #{residual_block_forward.3} parent=1 // loop_pre_header
      _
    $region3: #{residual_block_forward.3} parent=1 // loop_header
      %s19 = sphi 0, %s23
      %p20 = scmp.ge.s32.totalorder %s19, 4
      %s29 = sphi 0, %s31
      %s32 = sphi 0, %s29
      %s33 = sphi 0, %s32
      %s49 = sphi 0, %s33
      %s53 = sphi 0, %s53
      %s55 = sphi 0, %s53
      %s56 = sphi 0, %s55
      %s70 = sphi 0, %s56
      %s76 = sphi 0, %s78
      %s79 = sphi 0, %s76
      %s80 = sphi 0, %s79
      %s96 = sphi 0, %s80
      %s100 = sphi 0, %s100
      %s102 = sphi 0, %s100
      %s103 = sphi 0, %s102
      %s117 = sphi 0, %s103
      %s121 = sphi 0, %s121
      %s123 = sphi 0, %s121
      %s124 = sphi 0, %s123
      %s138 = sphi 0, %s124
      %s144 = sphi 0, %s146
      %s147 = sphi 0, %s144
      %s148 = sphi 0, %s147
      %s164 = sphi 0, %s148
    $region4: #{residual_block_forward.3} parent=1 // loop_header_branch
      %22 = sbr.rel (%p20) target = $region8
    $region5: #{residual_block_forward.3} parent=1 // loop_body
      %s24 = ssub.s32 %s19, 1
      %s25 = ssub.s32 %s19, 2
      %s26 = sadd.s32 %s19, 1
      %s27 = ssub.s32 %s19, %s26
      %p28 = scmp.eq.s32.totalorder %s27, 0
      %s30 = sadd.s32 %s29, 1
      %s31 = scalar_select %p28, %s29, %s30
      %p34 = pneg %p28
      %p35 = scmp.eq.s32.totalorder %s19, 1
      %p36 = por %p34, %p35
      %p37 = scmp.ne.s32.totalorder %s29, %s32
      %p38 = scmp.eq.s32.totalorder %s19, 0
      %p39 = por %p37, %p38
      %p40 = scmp.ne.s32.totalorder %s29, %s32
      %p41 = scmp.eq.s32.totalorder %s24, 1
      %p42 = por %p40, %p41
      %p43 = scmp.ne.s32.totalorder %s32, %s33
      %p44 = scmp.eq.s32.totalorder %s24, 0
      %p45 = por %p43, %p44
      %p46 = scmp.ne.s32.totalorder %s32, %s33
      %p47 = scmp.eq.s32.totalorder %s25, 1
      %p48 = por %p46, %p47
      %p50 = scmp.ne.s32.totalorder %s33, %s49
      %p51 = scmp.eq.s32.totalorder %s25, 0
      %p52 = por %p50, %p51
      %s54 = sadd.s32 %s53, 1
      %p57 = scmp.eq.s32.totalorder %s19, 1
      %p58 = scmp.ne.s32.totalorder %s53, %s55
      %p59 = scmp.eq.s32.totalorder %s19, 0
      %p60 = por %p58, %p59
      %p61 = scmp.ne.s32.totalorder %s53, %s55
      %p62 = scmp.eq.s32.totalorder %s24, 1
      %p63 = por %p61, %p62
      %p64 = scmp.ne.s32.totalorder %s55, %s56
      %p65 = scmp.eq.s32.totalorder %s24, 0
      %p66 = por %p64, %p65
      %p67 = scmp.ne.s32.totalorder %s55, %s56
      %p68 = scmp.eq.s32.totalorder %s25, 1
      %p69 = por %p67, %p68
      %p71 = scmp.ne.s32.totalorder %s56, %s70
      %p72 = scmp.eq.s32.totalorder %s25, 0
      %p73 = por %p71, %p72
      %s74 = ssub.s32 %s19, %s26
      %p75 = scmp.eq.s32.totalorder %s74, 0
      %s77 = sadd.s32 %s76, 1
      %s78 = scalar_select %p75, %s76, %s77
      %p81 = pneg %p75
      %p82 = scmp.eq.s32.totalorder %s19, 1
      %p83 = por %p81, %p82
      %p84 = scmp.ne.s32.totalorder %s76, %s79
      %p85 = scmp.eq.s32.totalorder %s19, 0
      %p86 = por %p84, %p85
      %p87 = scmp.ne.s32.totalorder %s76, %s79
      %p88 = scmp.eq.s32.totalorder %s24, 1
      %p89 = por %p87, %p88
      %p90 = scmp.ne.s32.totalorder %s79, %s80
      %p91 = scmp.eq.s32.totalorder %s24, 0
      %p92 = por %p90, %p91
      %p93 = scmp.ne.s32.totalorder %s79, %s80
      %p94 = scmp.eq.s32.totalorder %s25, 1
      %p95 = por %p93, %p94
      %p97 = scmp.ne.s32.totalorder %s80, %s96
      %p98 = scmp.eq.s32.totalorder %s25, 0
      %p99 = por %p97, %p98
      %s101 = sadd.s32 %s100, 1
      %p104 = scmp.eq.s32.totalorder %s19, 1
      %p105 = scmp.ne.s32.totalorder %s100, %s102
      %p106 = scmp.eq.s32.totalorder %s19, 0
      %p107 = por %p105, %p106
      %p108 = scmp.ne.s32.totalorder %s100, %s102
      %p109 = scmp.eq.s32.totalorder %s24, 1
      %p110 = por %p108, %p109
      %p111 = scmp.ne.s32.totalorder %s102, %s103
      %p112 = scmp.eq.s32.totalorder %s24, 0
      %p113 = por %p111, %p112
      %p114 = scmp.ne.s32.totalorder %s102, %s103
      %p115 = scmp.eq.s32.totalorder %s25, 1
      %p116 = por %p114, %p115
      %p118 = scmp.ne.s32.totalorder %s103, %s117
      %p119 = scmp.eq.s32.totalorder %s25, 0
      %p120 = por %p118, %p119
      %s122 = sadd.s32 %s121, 1
      %p125 = scmp.eq.s32.totalorder %s19, 1
      %p126 = scmp.ne.s32.totalorder %s121, %s123
      %p127 = scmp.eq.s32.totalorder %s19, 0
      %p128 = por %p126, %p127
      %p129 = scmp.ne.s32.totalorder %s121, %s123
      %p130 = scmp.eq.s32.totalorder %s24, 1
      %p131 = por %p129, %p130
      %p132 = scmp.ne.s32.totalorder %s123, %s124
      %p133 = scmp.eq.s32.totalorder %s24, 0
      %p134 = por %p132, %p133
      %p135 = scmp.ne.s32.totalorder %s123, %s124
      %p136 = scmp.eq.s32.totalorder %s25, 1
      %p137 = por %p135, %p136
      %p139 = scmp.ne.s32.totalorder %s124, %s138
      %p140 = scmp.eq.s32.totalorder %s25, 0
      %p141 = por %p139, %p140
      %s142 = ssub.s32 %s19, %s26
      %p143 = scmp.eq.s32.totalorder %s142, 0
      %s145 = sadd.s32 %s144, 1
      %s146 = scalar_select %p143, %s144, %s145
      %p149 = pneg %p143
      %p150 = scmp.eq.s32.totalorder %s19, 1
      %p151 = por %p149, %p150
      %p152 = scmp.ne.s32.totalorder %s144, %s147
      %p153 = scmp.eq.s32.totalorder %s19, 0
      %p154 = por %p152, %p153
      %p155 = scmp.ne.s32.totalorder %s144, %s147
      %p156 = scmp.eq.s32.totalorder %s24, 1
      %p157 = por %p155, %p156
      %p158 = scmp.ne.s32.totalorder %s147, %s148
      %p159 = scmp.eq.s32.totalorder %s24, 0
      %p160 = por %p158, %p159
      %p161 = scmp.ne.s32.totalorder %s147, %s148
      %p162 = scmp.eq.s32.totalorder %s25, 1
      %p163 = por %p161, %p162
      %p165 = scmp.ne.s32.totalorder %s148, %s164
      %p166 = scmp.eq.s32.totalorder %s25, 0
      %p167 = por %p165, %p166
      %p168 = scmp.le.s32.totalorder 1, %s19
      %p169 = scmp.lt.s32.totalorder %s19, 3
      %p170 = pnand %p168, %p169
      %p171 = pneg %p170
      // Predicated region
      $region9: #{residual_block_forward.3} parent=5 // pred_check
        _
      $region10: #{residual_block_forward.3} parent=5 // pred_check_branch
        %173 = sbr.rel (%p170) target = $region12
      $region11: #{residual_block_forward.3} parent=5 // pred_region
        %s174 = ssub.s32 %s19, 1
        // Predicated region
        $region13: #{residual_block_forward.3} parent=11 // pred_check
          %p175 = pneg %p66
        $region14: #{residual_block_forward.3} parent=11 // pred_check_branch
          %177 = sbr.rel (%p175) target = $region16
        $region15: #{residual_block_forward.3} parent=11 // pred_region
          %s179 = ssub.s32 640, 640
          %180 = vsyncadd [#allocation6], %s179
          %s181 = sshll.u32 [#allocation5], 4
          %s182 = int_to_ptr.vmem [resolvable:$true] %s181
          %187 = dma.hbm_to_vmem [thread:$0]  %s1, 640, %s182, [#allocation6], 64, 64, 4
        $region16: #{residual_block_forward.3} parent=11 // pred_fallthru
          _
        // Predicated region
        $region17: #{residual_block_forward.3} parent=11 // pred_check
          %p188 = pneg %p113
        $region18: #{residual_block_forward.3} parent=11 // pred_check_branch
          %190 = sbr.rel (%p188) target = $region20
        $region19: #{residual_block_forward.3} parent=11 // pred_region
          %s192 = ssub.s32 128, 128
          %193 = vsyncadd [#allocation6], %s192
          %s194 = sshll.u32 [#allocation8], 4
          %s195 = int_to_ptr.vmem [resolvable:$true] %s194
          %200 = dma.hbm_to_vmem [thread:$0]  %s3, 128, %s195, [#allocation6], 64, 64, 4
        $region20: #{residual_block_forward.3} parent=11 // pred_fallthru
          _
        // Predicated region
        $region21: #{residual_block_forward.3} parent=11 // pred_check
          %p201 = pneg %p134
        $region22: #{residual_block_forward.3} parent=11 // pred_check_branch
          %203 = sbr.rel (%p201) target = $region24
        $region23: #{residual_block_forward.3} parent=11 // pred_region
          %s205 = ssub.s32 16, 16
          %206 = vsyncadd [#allocation10], %s205
          %s208 = sshll.u32 [#allocation9], 4
          %s209 = int_to_ptr.vmem [resolvable:$true] %s208
          %211 = dma.hbm_to_vmem [thread:$0]  %s4, 16, %s209, [#allocation10]
        $region24: #{residual_block_forward.3} parent=11 // pred_fallthru
          _
      $region12: #{residual_block_forward.3} parent=5 // pred_fallthru
        _
      %p212 = scmp.lt.s32.totalorder %s19, 2
      // Predicated region
      $region25: #{residual_block_forward.3} parent=5 // pred_check
        %p213 = pneg %p212
      $region26: #{residual_block_forward.3} parent=5 // pred_check_branch
        %215 = sbr.rel (%p213) target = $region28
      $region27: #{residual_block_forward.3} parent=5 // pred_region
        // Predicated region
        $region29: #{residual_block_forward.3} parent=27 // pred_check
          %p216 = pneg %p39
        $region30: #{residual_block_forward.3} parent=27 // pred_check_branch
          %218 = sbr.rel (%p216) target = $region32
        $region31: #{residual_block_forward.3} parent=27 // pred_region
          %s219 = sand.u32 %s19, 1
          %s220 = scalar_lea.sflag [#allocation3], %s219
          %s221 = sand.u32 %s29, 1
          %s222 = smul.addr %s221, 32
          %s223 = scalar_lea.vmem [#allocation2], %s222
          %s224 = smul.u32 8, %s19
          %s226 = ssub.s32 512, 512
          %227 = vsyncadd %s220, %s226
          %s228 = smul.addr %s224, 64
          %s229 = scalar_lea.hbm %s0, %s228
          %s230 = sshll.u32 %s223, 4
          %s231 = int_to_ptr.vmem [resolvable:$true] %s230
          %236 = dma.hbm_to_vmem [thread:$0]  %s229, 512, %s231, %s220, 64, 64, 4
        $region32: #{residual_block_forward.3} parent=27 // pred_fallthru
          _
        // Predicated region
        $region33: #{residual_block_forward.3} parent=27 // pred_check
          %p237 = pneg %p86
        $region34: #{residual_block_forward.3} parent=27 // pred_check_branch
          %239 = sbr.rel (%p237) target = $region36
        $region35: #{residual_block_forward.3} parent=27 // pred_region
          %s240 = sand.u32 %s19, 1
          %s241 = scalar_lea.sflag [#allocation3], %s240
          %s242 = sand.u32 %s76, 1
          %s243 = smul.addr %s242, 32
          %s244 = scalar_lea.vmem [#allocation7], %s243
          %s245 = smul.u32 8, %s19
          %s247 = ssub.s32 512, 512
          %248 = vsyncadd %s241, %s247
          %s249 = smul.addr %s245, 64
          %s250 = scalar_lea.hbm %s2, %s249
          %s251 = sshll.u32 %s244, 4
          %s252 = int_to_ptr.vmem [resolvable:$true] %s251
          %257 = dma.hbm_to_vmem [thread:$0]  %s250, 512, %s252, %s241, 64, 64, 4
        $region36: #{residual_block_forward.3} parent=27 // pred_fallthru
          _
      $region28: #{residual_block_forward.3} parent=5 // pred_fallthru
        _
      %p258 = scmp.le.s32.totalorder 1, %s19
      %p259 = scmp.lt.s32.totalorder %s19, 3
      %p260 = pnand %p258, %p259
      %p261 = pneg %p260
      // Predicated region
      $region37: #{residual_block_forward.3} parent=5 // pred_check
        _
      $region38: #{residual_block_forward.3} parent=5 // pred_check_branch
        %263 = sbr.rel (%p260) target = $region40
      $region39: #{residual_block_forward.3} parent=5 // pred_region
        %s264 = ssub.s32 %s19, 1
        %s265 = sand.u32 %s24, 1
        %s266 = scalar_lea.sflag [#allocation3], %s265
        %s267 = sand.u32 %s32, 1
        %s268 = smul.addr %s267, 32
        %s269 = scalar_lea.vmem [#allocation2], %s268
        // Predicated region
        $region41: #{residual_block_forward.3} parent=39 // pred_check
          %p270 = pneg %p45
        $region42: #{residual_block_forward.3} parent=39 // pred_check_branch
          %272 = sbr.rel (%p270) target = $region44
        $region43: #{residual_block_forward.3} parent=39 // pred_region
          %273 = dma.done %s266, 512
        $region44: #{residual_block_forward.3} parent=39 // pred_fallthru
          _
        // Predicated region
        $region45: #{residual_block_forward.3} parent=39 // pred_check
          %p274 = pneg %p66
        $region46: #{residual_block_forward.3} parent=39 // pred_check_branch
          %276 = sbr.rel (%p274) target = $region48
        $region47: #{residual_block_forward.3} parent=39 // pred_region
          %277 = dma.done [#allocation6], 640
        $region48: #{residual_block_forward.3} parent=39 // pred_fallthru
          _
        %s278 = sand.u32 %s24, 1
        %s279 = scalar_lea.sflag [#allocation3], %s278
        %s280 = sand.u32 %s79, 1
        %s281 = smul.addr %s280, 32
        %s282 = scalar_lea.vmem [#allocation7], %s281
        // Predicated region
        $region49: #{residual_block_forward.3} parent=39 // pred_check
          %p283 = pneg %p92
        $region50: #{residual_block_forward.3} parent=39 // pred_check_branch
          %285 = sbr.rel (%p283) target = $region52
        $region51: #{residual_block_forward.3} parent=39 // pred_region
          %286 = dma.done %s279, 512
        $region52: #{residual_block_forward.3} parent=39 // pred_fallthru
          _
        // Predicated region
        $region53: #{residual_block_forward.3} parent=39 // pred_check
          %p287 = pneg %p113
        $region54: #{residual_block_forward.3} parent=39 // pred_check_branch
          %289 = sbr.rel (%p287) target = $region56
        $region55: #{residual_block_forward.3} parent=39 // pred_region
          %290 = dma.done [#allocation6], 128
        $region56: #{residual_block_forward.3} parent=39 // pred_fallthru
          _
        // Predicated region
        $region57: #{residual_block_forward.3} parent=39 // pred_check
          %p291 = pneg %p134
        $region58: #{residual_block_forward.3} parent=39 // pred_check_branch
          %293 = sbr.rel (%p291) target = $region60
        $region59: #{residual_block_forward.3} parent=39 // pred_region
          %294 = dma.done [#allocation10], 16
        $region60: #{residual_block_forward.3} parent=39 // pred_fallthru
          _
        %s295 = sand.u32 %s24, 1
        %s296 = scalar_lea.sflag [#allocation3], %s295
        %s297 = sand.u32 %s32, 1
        %s298 = smul.addr %s297, 32
        %s299 = scalar_lea.vmem [#allocation2], %s298
        %p300 = pneg %p45
        %p301 = pneg %p42
        %p302 = pneg %p66
        %p303 = pneg %p63
        %s304 = sand.u32 %s24, 1
        %s305 = scalar_lea.sflag [#allocation3], %s304
        %s306 = sand.u32 %s79, 1
        %s307 = smul.addr %s306, 32
        %s308 = scalar_lea.vmem [#allocation7], %s307
        %p309 = pneg %p92
        %p310 = pneg %p89
        %p311 = pneg %p113
        %p312 = pneg %p110
        %p313 = pneg %p134
        %p314 = pneg %p131
        %p315 = pneg %p160
        %p316 = pneg %p157
        %s317 = sand.u32 %s147, 1
        %s318 = scalar_lea.sflag [#allocation4], %s317
        %s319 = sand.u32 %s147, 1
        %s320 = smul.addr %s319, 32
        %s321 = scalar_lea.vmem [#allocation11], %s320
        %s322 = smul.u32 8, %s24
        %s323 = smul.u32 8, %s24
        %s324 = smul.u32 8, %s24
        %v326 = vld [vmem:[%s269] sm:$0xf]
        %v327 = vld [vmem:[%s269 + $0x4] sm:$0xf]
        %v328 = vld [vmem:[%s269 + $0x8] sm:$0xf]
        %v329 = vld [vmem:[%s269 + $0xc] sm:$0xf]
        %v330 = vld [vmem:[%s269 + $0x10] sm:$0xf]
        %v331 = vld [vmem:[%s269 + $0x14] sm:$0xf]
        %v332 = vld [vmem:[%s269 + $0x18] sm:$0xf]
        %v333 = vld [vmem:[%s269 + $0x1c] sm:$0xf]
        %v334 = vld [vmem:[#allocation5] sm:$0xf]
        %v335 = vld [vmem:[#allocation5 + $0x4] sm:$0xf]
        %v336 = vld [vmem:[#allocation5 + $0x8] sm:$0xf]
        %v337 = vld [vmem:[#allocation5 + $0xc] sm:$0xf]
        %v338 = vld [vmem:[#allocation5 + $0x10] sm:$0xf]
        %v339 = vld [vmem:[#allocation5 + $0x14] sm:$0xf]
        %v340 = vld [vmem:[#allocation5 + $0x18] sm:$0xf]
        %v341 = vld [vmem:[#allocation5 + $0x1c] sm:$0xf]
        %v342 = vld [vmem:[#allocation5 + $0x20] sm:$0xf]
        %v343 = vld [vmem:[#allocation5 + $0x24] sm:$0xf]
        %v344 = vld [vmem:[%s282] sm:$0xf]
        %v345 = vld [vmem:[%s282 + $0x4] sm:$0xf]
        %v346 = vld [vmem:[%s282 + $0x8] sm:$0xf]
        %v347 = vld [vmem:[%s282 + $0xc] sm:$0xf]
        %v348 = vld [vmem:[%s282 + $0x10] sm:$0xf]
        %v349 = vld [vmem:[%s282 + $0x14] sm:$0xf]
        %v350 = vld [vmem:[%s282 + $0x18] sm:$0xf]
        %v351 = vld [vmem:[%s282 + $0x1c] sm:$0xf]
        %v352 = vld [vmem:[#allocation8] sm:$0xf]
        %v353 = vld [vmem:[#allocation8 + $0x4] sm:$0xf]
        %v362 = vunpack.c.l.b16 %v344
        %v363 = vunpack.c.l.b16 %v345
        %v364 = vunpack.c.l.b16 %v346
        %v365 = vunpack.c.l.b16 %v347
        %v366 = vunpack.c.l.b16 %v348
        %v367 = vunpack.c.l.b16 %v349
        %v368 = vunpack.c.l.b16 %v350
        %v369 = vunpack.c.l.b16 %v351
        %v370 = vpack.c.b16 %v363, %v362
        %v371 = vpack.c.b16 %v365, %v364
        %v372 = vpack.c.b16 %v367, %v366
        %v373 = vpack.c.b16 %v369, %v368
        %v376 = vunpack.c.l.b16 %v352
        %v377 = vunpack.c.l.b16 %v353
        %v378 = vpack.c.b16 %v377, %v376
        %vm380 = vcmask 130048
        %v382 = vsel %vm380, %v370, 0
        %v385 = vsel %vm380, %v371, 0
        %v388 = vsel %vm380, %v372, 0
        %v391 = vsel %vm380, %v373, 0
        %393 = vmatprep.subr.bf16.mxu0 0
        %394 = vmatpush1.bf16.msra.mxu0 %v378
        %395 = vmatprep.subr.bf16.mxu0 0
        %396 = vmatpush1.bf16.msra.mxu0 0
        %397 = vmatprep.subr.bf16.mxu0 0
        %398 = vmatpush1.bf16.msra.mxu0 0
        %399 = vmatprep.subr.bf16.mxu0 0
        %400 = vmatpush1.bf16.msra.mxu0 0
        %401 = vmatprep.subr.bf16.mxu0 0
        %402 = vmatpush1.bf16.msra.mxu0 0
        %403 = vmatprep.subr.bf16.mxu0 0
        %404 = vmatpush1.bf16.msra.mxu0 0
        %405 = vmatprep.subr.bf16.mxu0 0
        %406 = vmatpush1.bf16.msra.mxu0 0
        %407 = vmatprep.subr.bf16.mxu0 0
        %408 = vmatpush1.bf16.msra.mxu0 0
        %409 = vmatprep.subr.bf16.mxu0 0
        %410 = vmatpush1.bf16.msra.mxu0 0
        %411 = vmatprep.subr.bf16.mxu0 0
        %412 = vmatpush1.bf16.msra.mxu0 0
        %413 = vmatprep.subr.bf16.mxu0 0
        %414 = vmatpush1.bf16.msra.mxu0 0
        %415 = vmatprep.subr.bf16.mxu0 0
        %416 = vmatpush1.bf16.msra.mxu0 0
        %417 = vmatprep.subr.bf16.mxu0 0
        %418 = vmatpush1.bf16.msra.mxu0 0
        %419 = vmatprep.subr.bf16.mxu0 0
        %420 = vmatpush1.bf16.msra.mxu0 0
        %421 = vmatprep.subr.bf16.mxu0 0
        %422 = vmatpush1.bf16.msra.mxu0 0
        %423 = vmatprep.subr.bf16.mxu0 0
        %424 = vmatpush1.bf16.msra.mxu0 0
        %425 = vmatprep.mubr.bf16.mxu0 0
        %426 = vmatmul.mubr.bf16.gmra.mrb[0].mxu0 %v382
        %v427 = vpop.f32.mrb[0].mxu0
        %v428 = vadd.f32 0.0, %v427
        %v429 = vpop.f32.mrb[0].mxu0
        %v430 = vpop.f32.mrb[0].mxu0
        %v431 = vadd.f32 0.0, %v430
        %v432 = vpop.f32.mrb[0].mxu0
        %433 = vmatprep.mubr.bf16.mxu0 0
        %434 = vmatmul.mubr.bf16.gmra.mrb[0].mxu0 %v385
        %v435 = vpop.f32.mrb[0].mxu0
        %v436 = vadd.f32 0.0, %v435
        %v437 = vpop.f32.mrb[0].mxu0
        %v438 = vpop.f32.mrb[0].mxu0
        %v439 = vadd.f32 0.0, %v438
        %v440 = vpop.f32.mrb[0].mxu0
        %441 = vmatprep.mubr.bf16.mxu0 0
        %442 = vmatmul.mubr.bf16.gmra.mrb[0].mxu0 %v388
        %v443 = vpop.f32.mrb[0].mxu0
        %v444 = vadd.f32 0.0, %v443
        %v445 = vpop.f32.mrb[0].mxu0
        %v446 = vpop.f32.mrb[0].mxu0
        %v447 = vadd.f32 0.0, %v446
        %v448 = vpop.f32.mrb[0].mxu0
        %449 = vmatprep.mubr.bf16.mxu0 0
        %450 = vmatmul.mubr.bf16.gmra.mrb[0].mxu0 %v391
        %v451 = vpop.f32.mrb[0].mxu0
        %v452 = vadd.f32 0.0, %v451
        %v453 = vpop.f32.mrb[0].mxu0
        %v454 = vpop.f32.mrb[0].mxu0
        %v455 = vadd.f32 0.0, %v454
        %v456 = vpop.f32.mrb[0].mxu0
        %457 = vdwg.mxu0
        %v466 = vunpack.c.l.b16 %v326
        %v467 = vunpack.c.l.b16 %v327
        %v468 = vunpack.c.l.b16 %v328
        %v469 = vunpack.c.l.b16 %v329
        %v470 = vunpack.c.l.b16 %v330
        %v471 = vunpack.c.l.b16 %v331
        %v472 = vunpack.c.l.b16 %v332
        %v473 = vunpack.c.l.b16 %v333
        %v474 = vpack.c.b16 %v467, %v466
        %v475 = vpack.c.b16 %v469, %v468
        %v476 = vpack.c.b16 %v471, %v470
        %v477 = vpack.c.b16 %v473, %v472
        %v488 = vunpack.c.l.b16 %v334
        %v489 = vunpack.c.l.b16 %v335
        %v490 = vunpack.c.l.b16 %v336
        %v491 = vunpack.c.l.b16 %v337
        %v492 = vunpack.c.l.b16 %v338
        %v493 = vunpack.c.l.b16 %v339
        %v494 = vunpack.c.l.b16 %v340
        %v495 = vunpack.c.l.b16 %v341
        %v496 = vunpack.c.l.b16 %v342
        %v497 = vunpack.c.l.b16 %v343
        %v498 = vpack.c.b16 %v489, %v488
        %v499 = vpack.c.b16 %v491, %v490
        %v500 = vpack.c.b16 %v493, %v492
        %v501 = vpack.c.b16 %v495, %v494
        %v502 = vpack.c.b16 %v497, %v496
        %vm508 = vcmask 654336
        %v510 = vsel %vm508, %v474, 0
        %v513 = vsel %vm508, %v475, 0
        %v516 = vsel %vm508, %v476, 0
        %v519 = vsel %vm508, %v477, 0
        %521 = vmatprep.subr.bf16.mxu0 0
        %522 = vmatpush1.bf16.msra.mxu0 %v498
        %523 = vmatprep.subr.bf16.mxu0 0
        %524 = vmatpush1.bf16.msra.mxu0 %v499
        %525 = vmatprep.subr.bf16.mxu0 0
        %526 = vmatpush1.bf16.msra.mxu0 %v500
        %527 = vmatprep.subr.bf16.mxu0 0
        %528 = vmatpush1.bf16.msra.mxu0 %v501
        %529 = vmatprep.subr.bf16.mxu0 0
        %530 = vmatpush1.bf16.msra.mxu0 %v502
        %531 = vmatprep.subr.bf16.mxu0 0
        %532 = vmatpush1.bf16.msra.mxu0 0
        %533 = vmatprep.subr.bf16.mxu0 0
        %534 = vmatpush1.bf16.msra.mxu0 0
        %535 = vmatprep.subr.bf16.mxu0 0
        %536 = vmatpush1.bf16.msra.mxu0 0
        %537 = vmatprep.subr.bf16.mxu0 0
        %538 = vmatpush1.bf16.msra.mxu0 0
        %539 = vmatprep.subr.bf16.mxu0 0
        %540 = vmatpush1.bf16.msra.mxu0 0
        %541 = vmatprep.subr.bf16.mxu0 0
        %542 = vmatpush1.bf16.msra.mxu0 0
        %543 = vmatprep.subr.bf16.mxu0 0
        %544 = vmatpush1.bf16.msra.mxu0 0
        %545 = vmatprep.subr.bf16.mxu0 0
        %546 = vmatpush1.bf16.msra.mxu0 0
        %547 = vmatprep.subr.bf16.mxu0 0
        %548 = vmatpush1.bf16.msra.mxu0 0
        %549 = vmatprep.subr.bf16.mxu0 0
        %550 = vmatpush1.bf16.msra.mxu0 0
        %551 = vmatprep.subr.bf16.mxu0 0
        %552 = vmatpush1.bf16.msra.mxu0 0
        %553 = vmatprep.mubr.bf16.mxu0 0
        %554 = vmatmul.mubr.bf16.gmra.mrb[0].mxu0 %v510
        %v555 = vpop.f32.mrb[0].mxu0
        %v556 = vadd.f32 %v428, %v555
        %v557 = vpop.f32.mrb[0].mxu0
        %v558 = vpop.f32.mrb[0].mxu0
        %v559 = vadd.f32 %v431, %v558
        %v560 = vpop.f32.mrb[0].mxu0
        %561 = vmatprep.mubr.bf16.mxu0 0
        %562 = vmatmul.mubr.bf16.gmra.mrb[0].mxu0 %v513
        %v563 = vpop.f32.mrb[0].mxu0
        %v564 = vadd.f32 %v436, %v563
        %v565 = vpop.f32.mrb[0].mxu0
        %v566 = vpop.f32.mrb[0].mxu0
        %v567 = vadd.f32 %v439, %v566
        %v568 = vpop.f32.mrb[0].mxu0
        %569 = vmatprep.mubr.bf16.mxu0 0
        %570 = vmatmul.mubr.bf16.gmra.mrb[0].mxu0 %v516
        %v571 = vpop.f32.mrb[0].mxu0
        %v572 = vadd.f32 %v444, %v571
        %v573 = vpop.f32.mrb[0].mxu0
        %v574 = vpop.f32.mrb[0].mxu0
        %v575 = vadd.f32 %v447, %v574
        %v576 = vpop.f32.mrb[0].mxu0
        %577 = vmatprep.mubr.bf16.mxu0 0
        %578 = vmatmul.mubr.bf16.gmra.mrb[0].mxu0 %v519
        %v579 = vpop.f32.mrb[0].mxu0
        %v580 = vadd.f32 %v452, %v579
        %v581 = vpop.f32.mrb[0].mxu0
        %v582 = vpop.f32.mrb[0].mxu0
        %v583 = vadd.f32 %v455, %v582
        %v584 = vpop.f32.mrb[0].mxu0
        %585 = vdwg.mxu0
        %v586 = vld [vmem:[#allocation9] sm:$0x1]
        %v588 = vlaneseq
        %v589 = vshrl.u32 %v588, 7
        %v590 = vsub.s32 0, %v589
        %v591 = vrot.slane %v586, %v590
        %v593 = vadd.f32 %v556, %v591
        %v594 = vadd.f32 %v559, %v591
        %v595 = vadd.f32 %v564, %v591
        %v596 = vadd.f32 %v567, %v591
        %v597 = vadd.f32 %v572, %v591
        %v598 = vadd.f32 %v575, %v591
        %v599 = vadd.f32 %v580, %v591
        %v600 = vadd.f32 %v583, %v591
        %vm601 = vcmp.gt.f32.partialorder %v593, 0.0
        %vm602 = vcmp.gt.f32.partialorder %v594, 0.0
        %vm603 = vcmp.gt.f32.partialorder %v595, 0.0
        %vm604 = vcmp.gt.f32.partialorder %v596, 0.0
        %vm605 = vcmp.gt.f32.partialorder %v597, 0.0
        %vm606 = vcmp.gt.f32.partialorder %v598, 0.0
        %vm607 = vcmp.gt.f32.partialorder %v599, 0.0
        %vm608 = vcmp.gt.f32.partialorder %v600, 0.0
        %v609 = vmul.f32 %v593, 0.1
        %v610 = vmul.f32 %v594, 0.1
        %v611 = vmul.f32 %v595, 0.1
        %v612 = vmul.f32 %v596, 0.1
        %v613 = vmul.f32 %v597, 0.1
        %v614 = vmul.f32 %v598, 0.1
        %v615 = vmul.f32 %v599, 0.1
        %v616 = vmul.f32 %v600, 0.1
        %v617 = vsel %vm601, %v593, %v609
        %v618 = vsel %vm602, %v594, %v610
        %v619 = vsel %vm603, %v595, %v611
        %v620 = vsel %vm604, %v596, %v612
        %v621 = vsel %vm605, %v597, %v613
        %v622 = vsel %vm606, %v598, %v614
        %v623 = vsel %vm607, %v599, %v615
        %v624 = vsel %vm608, %v600, %v616
        %v625 = vpack.c.bf16 %v618, %v617
        %v626 = vpack.c.bf16 %v620, %v619
        %v627 = vpack.c.bf16 %v622, %v621
        %v628 = vpack.c.bf16 %v624, %v623
        %v633 = vunpack.c.l.b16 %v625
        %v634 = vunpack.c.h.b16 %v625
        %v635 = vunpack.c.l.b16 %v626
        %v636 = vunpack.c.h.b16 %v626
        %v637 = vunpack.c.l.b16 %v627
        %v638 = vunpack.c.h.b16 %v627
        %v639 = vunpack.c.l.b16 %v628
        %v640 = vunpack.c.h.b16 %v628
        %v641 = vpack.c.b16 %v633, %v633
        %v642 = vpack.c.b16 %v634, %v634
        %v643 = vpack.c.b16 %v635, %v635
        %v644 = vpack.c.b16 %v636, %v636
        %v645 = vpack.c.b16 %v637, %v637
        %v646 = vpack.c.b16 %v638, %v638
        %v647 = vpack.c.b16 %v639, %v639
        %v648 = vpack.c.b16 %v640, %v640
        %657 = vst [vmem:[%s321] sm:$0xf] %v641
        %658 = vst [vmem:[%s321 + $0x4] sm:$0xf] %v642
        %659 = vst [vmem:[%s321 + $0x8] sm:$0xf] %v643
        %660 = vst [vmem:[%s321 + $0xc] sm:$0xf] %v644
        %661 = vst [vmem:[%s321 + $0x10] sm:$0xf] %v645
        %662 = vst [vmem:[%s321 + $0x14] sm:$0xf] %v646
        %663 = vst [vmem:[%s321 + $0x18] sm:$0xf] %v647
        %664 = vst [vmem:[%s321 + $0x1c] sm:$0xf] %v648
        %s665 = sand.u32 %s147, 1
        %s666 = scalar_lea.sflag [#allocation4], %s665
        %s667 = sand.u32 %s147, 1
        %s668 = smul.addr %s667, 32
        %s669 = scalar_lea.vmem [#allocation11], %s668
        // Predicated region
        $region61: #{residual_block_forward.3} parent=39 // pred_check
          %p670 = pneg %p157
        $region62: #{residual_block_forward.3} parent=39 // pred_check_branch
          %672 = sbr.rel (%p670) target = $region64
        $region63: #{residual_block_forward.3} parent=39 // pred_region
          %s673 = smul.u32 8, %s24
          %s675 = ssub.s32 512, 512
          %676 = vsyncadd %s666, %s675
          %s677 = smul.addr %s673, 64
          %s678 = scalar_lea.hbm %s5, %s677
          %s679 = sshll.u32 %s669, 4
          %s680 = int_to_ptr.vmem [resolvable:$true] %s679
          %685 = dma.vmem_to_hbm [thread:$0]  %s680, 512, %s678, %s666, 64, 64, 4
        $region64: #{residual_block_forward.3} parent=39 // pred_fallthru
          _
      $region40: #{residual_block_forward.3} parent=5 // pred_fallthru
        _
      %p686 = scmp.le.s32.totalorder 2, %s19
      // Predicated region
      $region65: #{residual_block_forward.3} parent=5 // pred_check
        %p687 = pneg %p686
      $region66: #{residual_block_forward.3} parent=5 // pred_check_branch
        %689 = sbr.rel (%p687) target = $region68
      $region67: #{residual_block_forward.3} parent=5 // pred_region
        %s690 = ssub.s32 %s19, 2
        // Predicated region
        $region69: #{residual_block_forward.3} parent=67 // pred_check
          %p691 = pneg %p163
        $region70: #{residual_block_forward.3} parent=67 // pred_check_branch
          %693 = sbr.rel (%p691) target = $region72
        $region71: #{residual_block_forward.3} parent=67 // pred_region
          %s694 = sand.u32 %s148, 1
          %s695 = scalar_lea.sflag [#allocation4], %s694
          %s696 = sand.u32 %s148, 1
          %s697 = smul.addr %s696, 32
          %s698 = scalar_lea.vmem [#allocation11], %s697
          %699 = dma.done %s695, 512
        $region72: #{residual_block_forward.3} parent=67 // pred_fallthru
          _
      $region68: #{residual_block_forward.3} parent=5 // pred_fallthru
        _
    $region6: #{residual_block_forward.3} parent=1 // loop_footer
      %s23 = sadd.s32 1, %s19
    $region7: #{residual_block_forward.3} parent=1 // loop_footer_branch
      %18 = sbr.rel target = $region3
    $region8: #{residual_block_forward.3} parent=1 // loop_exit
      _
    %700 = vsyncpa [#allocation3], 1
    %s701 = scalar_lea.sflag [#allocation3], 1
    %702 = vsyncpa %s701, 1
    %703 = vsyncpa [#allocation6], 1
    %704 = vsyncpa [#allocation10], 1
    %705 = vsyncpa [#allocation4], 1
    %s706 = scalar_lea.sflag [#allocation4], 1
    %707 = vsyncpa %s706, 1

</llo_original>
